<compile_context>
chip_gen: v6e
topology: v6e:2x2x1
jax: 0.10.0
libtpu: 0.0.40
codegen_flags: <defaults>
</compile_context>

<pallas_src>
import jax
import jax.numpy as jnp
from jax.experimental import pallas as pl
from jax.experimental.pallas import tpu as pltpu


def _pos_embed_kernel(x_ref, pos_ref, o_ref):
    # x_ref: (tile_b, tile_f), pos_ref: (1, tile_f), o_ref: (tile_b, tile_f)
    o_ref[...] = x_ref[...] + pos_ref[...]


def positional_embeddings(x: jnp.ndarray, pos: jnp.ndarray) -> jnp.ndarray:
    """x: (B, N, D), pos: (N, D) -> (B, N, D) == x + pos[None]."""
    B, N, D = x.shape
    assert pos.shape == (N, D)
    F = N * D
    itemsize = jnp.dtype(x.dtype).itemsize

    # Lane-dense 2D view of the problem.
    x2 = x.reshape(B, F)
    pos2 = pos.reshape(1, F)

    # ---- tile sizing: ~4 MiB x-tiles so 2x(x) + 2x(out) + pos stays well
    # under the scoped-VMEM default on every generation (16/32/32 MiB). ----
    TARGET_TILE_BYTES = 4 * 1024 * 1024

    if F * itemsize * min(B, 8) <= TARGET_TILE_BYTES:
        tile_f = F  # full lane extent fits even with >=8 rows
    else:
        tile_f = max(128, ((TARGET_TILE_BYTES // (8 * itemsize)) // 128) * 128)
        tile_f = min(tile_f, F)

    rows_budget = max(1, TARGET_TILE_BYTES // (tile_f * itemsize))
    if rows_budget >= B:
        tile_b = B  # single row-block (full extent)
    else:
        tile_b = max(8, (rows_budget // 8) * 8)  # multiple of 8 sublanes

    grid = (pl.cdiv(B, tile_b), pl.cdiv(F, tile_f))

    cost = pl.CostEstimate(
        flops=B * F,
        transcendentals=0,
        bytes_accessed=(2 * B * F + F) * itemsize,
    )

    out2 = pl.pallas_call(
        _pos_embed_kernel,
        out_shape=jax.ShapeDtypeStruct((B, F), x.dtype),
        grid_spec=pltpu.PrefetchScalarGridSpec(
            num_scalar_prefetch=0,
            grid=grid,
            in_specs=[
                # x tile: (tile_b rows) x (tile_f lanes)
                pl.BlockSpec((tile_b, tile_f), lambda i, j: (i, j)),
                # positional table: same row-block every step, only lane axis moves
                pl.BlockSpec((1, tile_f), lambda i, j: (0, j)),
            ],
            out_specs=pl.BlockSpec((tile_b, tile_f), lambda i, j: (i, j)),
        ),
        compiler_params=pltpu.CompilerParams(
            dimension_semantics=("parallel", "parallel"),
            vmem_limit_bytes=32 * 1024 * 1024,
        ),
        cost_estimate=cost,
        # out = x + pos: reuse x's HBM buffer for the output.
        input_output_aliases={0: 0},
    )(x2, pos2)

    return out2.reshape(B, N, D)


if __name__ == "__main__":
    # Module config: num_pos=8, dim=32; input batch=2.
    B, N, D = 2, 8, 32
    key = jax.random.PRNGKey(0)
    kx, kp = jax.random.split(key)

    x = jax.random.normal(kx, (B, N, D), dtype=jnp.float32)
    # Deterministic "learned" parameter init (stands in for torch.randn(num_pos, dim)).
    pos = jax.random.normal(kp, (N, D), dtype=jnp.float32)

    fwd = jax.jit(positional_embeddings)
    out = jax.block_until_ready(fwd(x, pos))

    # Correctness check against the plain-JAX reference of the forward pass.
    ref = x + pos[None, :, :]
    assert out.shape == (B, N, D)
    assert jnp.allclose(out, ref, atol=1e-6, rtol=1e-6)

    print("KERNEL_OK")
</pallas_src>

<mosaic_0001>
module attributes {stable_mosaic.version = 11 : i64} {
  func.func @_pos_embed_kernel(%arg0: i32, %arg1: i32, %arg2: memref<2x256xf32, #tpu.memory_space<vmem>>, %arg3: memref<1x256xf32, #tpu.memory_space<vmem>>, %arg4: memref<2x256xf32, #tpu.memory_space<vmem>>) attributes {dimension_semantics = [#tpu.dimension_semantics<parallel>, #tpu.dimension_semantics<parallel>], iteration_bounds = array<i64: 1, 1>, scalar_prefetch = 0 : i64, scratch_operands = 0 : i64, tpu.core_type = #tpu.core_type<tc>, window_params = [{transform_indices = @transform_0, window_bounds = array<i64: 2, 256>}, {transform_indices = @transform_1, window_bounds = array<i64: 1, 256>}, {transform_indices = @transform_2, window_bounds = array<i64: 2, 256>}]} {
    %c0 = arith.constant 0 : index
    %c0_0 = arith.constant 0 : index
    %0 = vector.load %arg2[%c0, %c0_0] : memref<2x256xf32, #tpu.memory_space<vmem>>, vector<2x256xf32>
    %c0_1 = arith.constant 0 : index
    %c0_2 = arith.constant 0 : index
    %1 = vector.load %arg3[%c0_1, %c0_2] : memref<1x256xf32, #tpu.memory_space<vmem>>, vector<1x256xf32>
    %2 = vector.broadcast %1 : vector<1x256xf32> to vector<2x256xf32>
    %3 = arith.addf %0, %2 : vector<2x256xf32>
    %c0_3 = arith.constant 0 : index
    %c0_4 = arith.constant 0 : index
    %4 = vector.load %arg4[%c0_3, %c0_4] : memref<2x256xf32, #tpu.memory_space<vmem>>, vector<2x256xf32>
    tpu.vector_store %arg4[%c0_3, %c0_4], %3 {strides = array<i32>} : memref<2x256xf32, #tpu.memory_space<vmem>>, vector<2x256xf32>,
    return
  }
  func.func @transform_0(%arg0: i32, %arg1: i32) -> (i32, i32) {
    %c0_i32 = arith.constant 0 : i32
    return %arg0, %arg1 : i32, i32
  }
  func.func @transform_1(%arg0: i32, %arg1: i32) -> (i32, i32) {
    %c0_i32 = arith.constant 0 : i32
    %c0_i32_0 = arith.constant 0 : i32
    return %c0_i32, %arg1 : i32, i32
  }
  func.func @transform_2(%arg0: i32, %arg1: i32) -> (i32, i32) {
    %c0_i32 = arith.constant 0 : i32
    return %arg0, %arg1 : i32, i32
  }
}

</mosaic_0001>

<llo_original>
// kernel: positional_embeddings.1
$region0: #{positional_embeddings.1}
  #allocation0 [shape = 'u32[]', space=smem, size = 0x4, offset = 0x4, fixed_abs, tag = 'smem constant byte address 0x4 - core index']
  #allocation1 [shape = 'u32[144,128]{1,0:T(1,128)}', space=vmem, size = 0x12000, scoped, tag = 'internal scratch']
  %s0 = inlined_call_operand.vmem [shape: f32[2,256], index: 0, kind: input, shape index: {}, may-alias: {0,2}]
  %s1 = inlined_call_operand.vmem [shape: f32[1,256], index: 1, kind: input, shape index: {}]
  %s2 = inlined_call_operand.vmem [shape: f32[2,256], index: 2, kind: output, shape index: {}, may-alias: {0,2}]
  %s3 = sld [smem:[#allocation0]]
  $region18: #{positional_embeddings.1} parent=0
    _
  %s5 = ssub.s32 1, %s3
  %s6 = scalar_select 0, %s5, %s3
  // Predicated region
  $region2: #{positional_embeddings.1} parent=0 // pred_check
    _
  $region3: #{positional_embeddings.1} parent=0 // pred_check_branch
    %8 = sbr.rel (0) target = $region5
  $region4: #{positional_embeddings.1} parent=0 // pred_region
    _
  $region5: #{positional_embeddings.1} parent=0 // pred_fallthru
    _
  // Predicated region
  $region6: #{positional_embeddings.1} parent=0 // pred_check
    _
  $region7: #{positional_embeddings.1} parent=0 // pred_check_branch
    %10 = sbr.rel (0) target = $region9
  $region8: #{positional_embeddings.1} parent=0 // pred_region
    _
  $region9: #{positional_embeddings.1} parent=0 // pred_fallthru
    _
  %v11 = vld [vmem:[%s0] sm:$0xf]
  %v12 = vld [vmem:[%s1] sm:$0x3]
  %v14 = vlaneseq
  %v15 = vshrl.u32 %v14, 7
  %v16 = vsub.s32 0, %v15
  %v17 = vrot.slane %v12, %v16
  %v18 = vlaneseq
  %v19 = vshrl.u32 %v18, 7
  %v20 = vsub.s32 1, %v19
  %v21 = vrot.slane %v12, %v20
  %v22 = vcombine.low %v17, %v21
  %v24 = vunpack.c.l.s4 1983009808
  %v25 = vunpack.c.0.s8 %v24
  %v26 = vlaneseq
  %v27 = vshrl.u32 %v26, 7
  %v28 = vsub.s32 %v25, %v27
  %v29 = vrot.slane %v22, %v28
  %v31 = vadd.f32 %v11, %v29
  %32 = vst [vmem:[%s2] sm:$0xf] %v31
  // Predicated region
  $region10: #{positional_embeddings.1} parent=0 // pred_check
    _
  $region11: #{positional_embeddings.1} parent=0 // pred_check_branch
    %34 = sbr.rel (0) target = $region13
  $region12: #{positional_embeddings.1} parent=0 // pred_region
    _
  $region13: #{positional_embeddings.1} parent=0 // pred_fallthru
    _
  // Predicated region
  $region14: #{positional_embeddings.1} parent=0 // pred_check
    _
  $region15: #{positional_embeddings.1} parent=0 // pred_check_branch
    %36 = sbr.rel (0) target = $region17
  $region16: #{positional_embeddings.1} parent=0 // pred_region
    _
  $region17: #{positional_embeddings.1} parent=0 // pred_fallthru
    _

</llo_original>
